<compile_context>
chip_gen: v7x
topology: tpu7x:2x2x1
jax: 0.10.0
libtpu: 0.0.40
codegen_flags: <defaults>
</compile_context>

<pallas_src>
import jax
import jax.numpy as jnp
from jax.experimental import pallas as pl
from jax.experimental.pallas import tpu as pltpu


def _round_up(x, m):
    return ((x + m - 1) // m) * m


def _sublane(dtype):
    # Min second-to-last-dim tile: 8 for 4-byte, 16 for 2-byte, 32 for 1-byte dtypes.
    return max(8, 32 // jnp.dtype(dtype).itemsize)


def _tpu_budget():
    """(usable vmem cap in bytes with headroom, is_v5e)."""
    phys = 64 << 20  # conservative fallback (v7x per-TC size)
    try:
        phys = int(pltpu.get_tpu_info().vmem_capacity_bytes)
    except Exception:
        pass
    is_v5e = False
    try:
        kind = jax.devices()[0].device_kind.lower()
        is_v5e = ("v5 lite" in kind) or ("v5e" in kind) or ("v5litepod" in kind)
    except Exception:
        pass
    # Leave ~16 MiB for Mosaic internal scratch + double-buffered out/idx blocks.
    cap = max(32 << 20, phys - (16 << 20))
    return cap, is_v5e


def _choose_tile_d(v_pad, d_pad, t, itemsize, cap_bytes):
    """Largest multiple-of-128 D tile whose slab + working set fits ~3/4 of the cap."""
    budget = int(cap_bytes * 0.75)
    # per output column: table slab (single-buffered) + double-buffered out + f32 acc
    per_col = v_pad * itemsize + 2 * t * itemsize + t * 4
    # fixed: one-hot intermediate + double-buffered idx block (padded to (t,128) words)
    fixed = t * v_pad * 4 + 2 * t * 128 * 4
    max_cols = (budget - fixed) // per_col if per_col > 0 else d_pad
    tile_d = max(128, (int(max_cols) // 128) * 128)
    return min(d_pad, tile_d)


def _gather_kernel(idx_ref, table_ref, out_ref):
    # idx_ref:   (T, 1) int32 tile of clamped token indices (VMEM).
    # table_ref: (V_pad, tile_D) table slab, single-buffered (constant along token axis).
    # out_ref:   (T, tile_D) output tile (dense sublane/lane-aligned store).
    t = idx_ref.shape[0]
    v_pad = table_ref.shape[0]
    idx = idx_ref[...]                                                  # (T, 1)
    row_ids = jax.lax.broadcasted_iota(jnp.int32, (t, v_pad), 1)        # (T, V_pad)
    onehot = (row_ids == idx).astype(table_ref.dtype)                   # exact 0/1
    out_ref[...] = jnp.dot(
        onehot, table_ref[...], preferred_element_type=jnp.float32
    ).astype(out_ref.dtype)


def prompt_tuning_embedding(indices, table, *, block_tokens=None):
    """Pallas embedding gather: rows of `table` selected by `indices`.

    indices: int array, any shape (e.g. (batch, total_virtual_tokens))
    table:   (V, D) embedding weight
    returns: indices.shape + (D,), dtype of `table`

    NOTE: for tiny problems (n * D of a few KiB, e.g. the prompt-tuning demo below)
    jnp.take(table, indices, axis=0) beats any standalone pallas_call's launch cost;
    the right long-term answer at that size is fusing the gather into the consumer.
    TODO(synk): for V_pad beyond a few thousand rows the one-hot matmul becomes
    compute-bound (esp. v5e); switch to a scalar-prefetch pl.Element row-gather there.
    TODO(synk): the padded table copy should be cached / pre-padded by the caller so
    the V x D pad is not re-done every generation step.
    """
    v, d = table.shape
    dtype = table.dtype
    itemsize = jnp.dtype(dtype).itemsize
    sub = _sublane(dtype)

    cap, is_v5e = _tpu_budget()
    if block_tokens is None:
        block_tokens = 128 if is_v5e else 256   # match MXU width (128 vs 256)

    flat_idx = jnp.clip(indices.reshape(-1).astype(jnp.int32), 0, v - 1)
    n = flat_idx.shape[0]

    # Sublane-dense token tile: multiple of the dtype sublane count, <= block_tokens.
    t = min(_round_up(block_tokens, sub), _round_up(n, sub))
    n_pad = _round_up(n, t)
    if n_pad != n:
        flat_idx = jnp.pad(flat_idx, (0, n_pad - n))   # padded slots gather row 0
    flat_idx = flat_idx.reshape(n_pad, 1)

    v_pad = _round_up(v, sub)        # padded rows never selected (indices clamped)
    d_pad = _round_up(d, 128)        # lane-dense output stores

    # D tiling: slab that fits the VMEM budget; split in two when the token grid is
    # too short to give both v7x TensorCores work.
    tile_d = _choose_tile_d(v_pad, d_pad, t, itemsize, cap)
    nt = n_pad // t
    if nt <= 2 and d_pad // tile_d < 2 and d_pad >= 256:
        tile_d = min(tile_d, _round_up(d_pad // 2, 128))
    d_pad = _round_up(d_pad, tile_d)
    nd = d_pad // tile_d

    if (v_pad, d_pad) != (v, d):
        table_p = jnp.pad(table, ((0, v_pad - v), (0, d_pad - d)))
    else:
        table_p = table

    # VMEM estimate: single-buffered table slab + double-buffered out/idx + f32/onehot.
    est = (v_pad * tile_d * itemsize          # table slab (Buffered(1))
           + 2 * t * tile_d * itemsize        # output double buffer
           + 2 * t * 128 * 4                  # idx double buffer (padded lane dim)
           + t * tile_d * 4                   # f32 matmul result
           + t * v_pad * 4)                   # one-hot intermediate
    vmem_limit = int(min(cap, max(32 << 20, int(1.5 * est))))

    out = pl.pallas_call(
        _gather_kernel,
        out_shape=jax.ShapeDtypeStruct((n_pad, d_pad), dtype),
        grid_spec=pltpu.PrefetchScalarGridSpec(
            num_scalar_prefetch=0,
            grid=(nd, nt),                                       # D outer, tokens inner
            in_specs=[
                pl.BlockSpec((t, 1), lambda j, i: (i, 0)),       # token-index tile
                pl.BlockSpec((v_pad, tile_d), lambda j, i: (0, j),
                             pipeline_mode=pl.Buffered(1)),      # resident slab, 1 buffer
            ],
            out_specs=pl.BlockSpec((t, tile_d), lambda j, i: (i, j)),
        ),
        compiler_params=pltpu.CompilerParams(
            # Disjoint output tiles on both axes -> shardable across v7x TensorCores.
            dimension_semantics=("parallel", "parallel"),
            vmem_limit_bytes=vmem_limit,
        ),
    )(flat_idx, table_p)

    if n_pad != n or d_pad != d:
        out = out[:n, :d]
    return out.reshape(indices.shape + (d,))


if __name__ == "__main__":
    # Synthetic config (mirrors PromptTuningEmbedding.__init__ shapes):
    num_virtual_tokens = 8
    num_transformer_submodules = 1
    token_dim = 128
    total_virtual_tokens = num_virtual_tokens * num_transformer_submodules
    batch = 2

    key = jax.random.PRNGKey(0)
    k_w, k_i = jax.random.split(key)

    # Deterministic synthetic init of the embedding weight.
    # TODO(synk): 'vocab'/'embedding' init paths load external weights; replaced by random init.
    embedding_weight = jax.random.normal(
        k_w, (total_virtual_tokens, token_dim), dtype=jnp.float32
    )

    # Prompt-token indices, as the forward pass receives them.
    indices = jax.random.randint(
        k_i, (batch, total_virtual_tokens), 0, total_virtual_tokens, dtype=jnp.int32
    )

    out = prompt_tuning_embedding(indices, embedding_weight)
    out = jax.block_until_ready(out)

    # Reference check against plain JAX gather (== torch.nn.Embedding forward).
    ref = jnp.take(embedding_weight, indices, axis=0)
    assert out.shape == (batch, total_virtual_tokens, token_dim)
    assert out.dtype == jnp.float32
    assert jnp.allclose(out, ref), "Pallas gather mismatch vs reference"

    print("KERNEL_OK")
</pallas_src>

<mosaic_0001>
module attributes {stable_mosaic.version = 11 : i64} {
  func.func @_gather_kernel(%arg0: i32, %arg1: i32, %arg2: memref<16x1xi32, #tpu.memory_space<vmem>>, %arg3: memref<8x128xf32, #tpu.memory_space<vmem>>, %arg4: memref<16x128xf32, #tpu.memory_space<vmem>>) attributes {dimension_semantics = [#tpu.dimension_semantics<parallel>, #tpu.dimension_semantics<parallel>], iteration_bounds = array<i64: 1, 1>, scalar_prefetch = 0 : i64, scratch_operands = 0 : i64, tpu.core_type = #tpu.core_type<tc>, window_params = [{transform_indices = @transform_0, window_bounds = array<i64: 16, 1>}, {pipeline_mode = #tpu.pipeline_mode<synchronous>, transform_indices = @transform_1, window_bounds = array<i64: 8, 128>}, {transform_indices = @transform_2, window_bounds = array<i64: 16, 128>}]} {
    %c0 = arith.constant 0 : index
    %c0_0 = arith.constant 0 : index
    %0 = vector.load %arg2[%c0, %c0_0] : memref<16x1xi32, #tpu.memory_space<vmem>>, vector<16x1xi32>
    %1 = tpu.iota {dimensions = array<i32: 1>} : vector<16x8xi32>
    %2 = vector.broadcast %0 : vector<16x1xi32> to vector<16x8xi32>
    %3 = arith.cmpi eq, %1, %2 : vector<16x8xi32>
    %4 = arith.extui %3 : vector<16x8xi1> to vector<16x8xi32>
    %5 = arith.sitofp %4 : vector<16x8xi32> to vector<16x8xf32>
    %c0_1 = arith.constant 0 : index
    %c0_2 = arith.constant 0 : index
    %6 = vector.load %arg3[%c0_1, %c0_2] : memref<8x128xf32, #tpu.memory_space<vmem>>, vector<8x128xf32>
    %cst = arith.constant dense<0.000000e+00> : vector<16x128xf32>
    %7 = tpu.matmul %5, %6, %cst {dimension_numbers = #tpu.dot_dimension_numbers<[1], [0], [0], [1], [0, 0, 1, 1], [], []>} : vector<16x8xf32>, vector<8x128xf32>, vector<16x128xf32> -> vector<16x128xf32>
    %c0_3 = arith.constant 0 : index
    %c0_4 = arith.constant 0 : index
    %8 = vector.load %arg4[%c0_3, %c0_4] : memref<16x128xf32, #tpu.memory_space<vmem>>, vector<16x128xf32>
    tpu.vector_store %arg4[%c0_3, %c0_4], %7 {strides = array<i32>} : memref<16x128xf32, #tpu.memory_space<vmem>>, vector<16x128xf32>,
    return
  }
  func.func @transform_0(%arg0: i32, %arg1: i32) -> (i32, i32) {
    %c0_i32 = arith.constant 0 : i32
    %c0_i32_0 = arith.constant 0 : i32
    return %arg1, %c0_i32 : i32, i32
  }
  func.func @transform_1(%arg0: i32, %arg1: i32) -> (i32, i32) {
    %c0_i32 = arith.constant 0 : i32
    %c0_i32_0 = arith.constant 0 : i32
    return %c0_i32, %arg0 : i32, i32
  }
  func.func @transform_2(%arg0: i32, %arg1: i32) -> (i32, i32) {
    %c0_i32 = arith.constant 0 : i32
    return %arg1, %arg0 : i32, i32
  }
}

</mosaic_0001>

<llo_original>
// kernel: tpu_custom_call.1
$region0: #{tpu_custom_call.1}
  #allocation0 [shape = 'u32[]', space=smem, size = 0x4, offset = 0x4, fixed_abs, tag = 'smem constant byte address 0x4 - core index']
  #allocation1 [shape = 'u32[144,128]{1,0:T(1,128)}', space=vmem, size = 0x12000, scoped, tag = 'internal scratch']
  %s0 = inlined_call_operand.vmem [shape: s32[16,1], index: 0, kind: input, shape index: {}]
  %s1 = inlined_call_operand.vmem [shape: f32[8,128], index: 1, kind: input, shape index: {}]
  %s2 = inlined_call_operand.hbm [shape: f32[16,128], index: 2, kind: output, shape index: {}]
  %s3 = sld [smem:[#allocation0]]
  $region18: #{tpu_custom_call.1} parent=0
    _
  %s5 = ssub.s32 1, %s3
  %s6 = scalar_select 0, %s5, %s3
  $region1: #{tpu_custom_call.1} parent=0
    #allocation2 [shape = 'u8[8192]{0}', space=vmem, size = 0x2000, scoped, tag = 'output window, operand 0, single buffered']
    #allocation3 [shape = 's32[1]{0}', space=sflag, size = 0x4, scoped, tag = 'scoped memory for tpu_custom_call.1']
    %7 = vsyncpa [#allocation3], 0
    // Predicated region
    $region2: #{tpu_custom_call.1} parent=1 // pred_check
      _
    $region3: #{tpu_custom_call.1} parent=1 // pred_check_branch
      %9 = sbr.rel (0) target = $region5
    $region4: #{tpu_custom_call.1} parent=1 // pred_region
      _
    $region5: #{tpu_custom_call.1} parent=1 // pred_fallthru
      _
    // Predicated region
    $region6: #{tpu_custom_call.1} parent=1 // pred_check
      _
    $region7: #{tpu_custom_call.1} parent=1 // pred_check_branch
      %11 = sbr.rel (0) target = $region9
    $region8: #{tpu_custom_call.1} parent=1 // pred_region
      _
    $region9: #{tpu_custom_call.1} parent=1 // pred_fallthru
      _
    %v12 = vld [vmem:[%s0] sm:$0xff]
    %v13 = vld [vmem:[%s0 + $0x8] sm:$0xff]
    %v14 = vlaneseq
    %v15 = vand.u32 %v14, 127
    %16 = vset.pattern.permute.xlu0 0
    %17 = vperm.xlu0 %16, %v12
    %v18 = vpop.permute.xlu0 %17
    %19 = vset.pattern.permute.xlu0 0
    %20 = vperm.xlu0 %19, %v13
    %v21 = vpop.permute.xlu0 %20
    %vm22 = vcmp.eq.s32.totalorder %v15, %v18
    %vm23 = vcmp.eq.s32.totalorder %v15, %v21
    %v24 = vsel %vm22, 1, 0
    %v25 = vsel %vm23, 1, 0
    %v26 = vcvt.s32.f32 %v24
    %v27 = vcvt.s32.f32 %v25
    %v28 = vld [vmem:[%s1] sm:$0xff]
    %vm29 = vcmask 64512
    %v31 = vsel %vm29, %v26, 0
    %v34 = vsel %vm29, %v27, 0
    %36 = vmatprep.subr.mxu0 0.0
    %37 = vmatpush1.msra.mxu0 %v28
    %38 = vmatprep.subr.mxu0 0.0
    %39 = vmatpush1.msra.mxu0 0.0
    %40 = vmatprep.subr.mxu0 0.0
    %41 = vmatpush1.msra.mxu0 0.0
    %42 = vmatprep.subr.mxu0 0.0
    %43 = vmatpush1.msra.mxu0 0.0
    %44 = vmatprep.subr.mxu0 0.0
    %45 = vmatpush1.msra.mxu0 0.0
    %46 = vmatprep.subr.mxu0 0.0
    %47 = vmatpush1.msra.mxu0 0.0
    %48 = vmatprep.subr.mxu0 0.0
    %49 = vmatpush1.msra.mxu0 0.0
    %50 = vmatprep.subr.mxu0 0.0
    %51 = vmatpush1.msra.mxu0 0.0
    %52 = vmatprep.subr.mxu0 0.0
    %53 = vmatpush1.msra.mxu0 0.0
    %54 = vmatprep.subr.mxu0 0.0
    %55 = vmatpush1.msra.mxu0 0.0
    %56 = vmatprep.subr.mxu0 0.0
    %57 = vmatpush1.msra.mxu0 0.0
    %58 = vmatprep.subr.mxu0 0.0
    %59 = vmatpush1.msra.mxu0 0.0
    %60 = vmatprep.subr.mxu0 0.0
    %61 = vmatpush1.msra.mxu0 0.0
    %62 = vmatprep.subr.mxu0 0.0
    %63 = vmatpush1.msra.mxu0 0.0
    %64 = vmatprep.subr.mxu0 0.0
    %65 = vmatpush1.msra.mxu0 0.0
    %66 = vmatprep.subr.mxu0 0.0
    %67 = vmatpush1.msra.mxu0 0.0
    %68 = vmatprep.subr.mxu0 0.0
    %69 = vmatpush1.msra.mxu0 0.0
    %70 = vmatprep.subr.mxu0 0.0
    %71 = vmatpush1.msra.mxu0 0.0
    %72 = vmatprep.subr.mxu0 0.0
    %73 = vmatpush1.msra.mxu0 0.0
    %74 = vmatprep.subr.mxu0 0.0
    %75 = vmatpush1.msra.mxu0 0.0
    %76 = vmatprep.subr.mxu0 0.0
    %77 = vmatpush1.msra.mxu0 0.0
    %78 = vmatprep.subr.mxu0 0.0
    %79 = vmatpush1.msra.mxu0 0.0
    %80 = vmatprep.subr.mxu0 0.0
    %81 = vmatpush1.msra.mxu0 0.0
    %82 = vmatprep.subr.mxu0 0.0
    %83 = vmatpush1.msra.mxu0 0.0
    %84 = vmatprep.subr.mxu0 0.0
    %85 = vmatpush1.msra.mxu0 0.0
    %86 = vmatprep.subr.mxu0 0.0
    %87 = vmatpush1.msra.mxu0 0.0
    %88 = vmatprep.subr.mxu0 0.0
    %89 = vmatpush1.msra.mxu0 0.0
    %90 = vmatprep.subr.mxu0 0.0
    %91 = vmatpush1.msra.mxu0 0.0
    %92 = vmatprep.subr.mxu0 0.0
    %93 = vmatpush1.msra.mxu0 0.0
    %94 = vmatprep.subr.mxu0 0.0
    %95 = vmatpush1.msra.mxu0 0.0
    %96 = vmatprep.subr.mxu0 0.0
    %97 = vmatpush1.msra.mxu0 0.0
    %98 = vmatprep.subr.mxu0 0.0
    %99 = vmatpush1.msra.mxu0 0.0
    %100 = vmatprep.mubr.f32.mxu0 0.0
    %101 = vmatmul.mubr.f32.gmra.mrb[0].mxu0 %v31
    %v102 = vpop.f32.mrb[0].mxu0
    %v103 = vadd.f32 0.0, %v102
    %v104 = vpop.f32.mrb[0].mxu0
    %105 = vmatprep.mubr.f32.mxu0 0.0
    %106 = vmatmul.mubr.f32.gmra.mrb[0].mxu0 %v34
    %v107 = vpop.f32.mrb[0].mxu0
    %v108 = vadd.f32 0.0, %v107
    %v109 = vpop.f32.mrb[0].mxu0
    %110 = vdwg.mxu0
    %111 = vst [vmem:[#allocation2] sm:$0xff] %v103
    %112 = vst [vmem:[#allocation2 + $0x8] sm:$0xff] %v108
    // Predicated region
    $region10: #{tpu_custom_call.1} parent=1 // pred_check
      _
    $region11: #{tpu_custom_call.1} parent=1 // pred_check_branch
      %114 = sbr.rel (0) target = $region13
    $region12: #{tpu_custom_call.1} parent=1 // pred_region
      %s116 = ssub.s32 256, 256
      %117 = vsyncadd [#allocation3], %s116
      %s118 = sshll.u32 [#allocation2], 4
      %s119 = int_to_ptr.vmem [resolvable:$true] %s118
      %124 = dma.vmem_to_hbm [thread:$0]  %s119, 256, %s2, [#allocation3], 128, 128, 8
    $region13: #{tpu_custom_call.1} parent=1 // pred_fallthru
      _
    // Predicated region
    $region14: #{tpu_custom_call.1} parent=1 // pred_check
      _
    $region15: #{tpu_custom_call.1} parent=1 // pred_check_branch
      %126 = sbr.rel (0) target = $region17
    $region16: #{tpu_custom_call.1} parent=1 // pred_region
      %127 = dma.done [#allocation3], 256
    $region17: #{tpu_custom_call.1} parent=1 // pred_fallthru
      _
    %128 = vsyncpa [#allocation3], 1

</llo_original>
